<compile_context>
chip_gen: v7x
topology: tpu7x:2x2x1
jax: 0.10.0
libtpu: 0.0.40
codegen_flags: <defaults>
</compile_context>

<pallas_src>
import jax
import jax.numpy as jnp
from jax.experimental import pallas as pl
from jax.experimental.pallas import tpu as pltpu

HIDDEN_DIM = 256          # ControlModule(hidden_dim=256)
LSTM_HIDDEN = 64          # ControlRefinementLSTM hidden_dim
F32 = jnp.float32
BF16 = jnp.bfloat16

# Row offsets inside the packed weight blobs (all multiples of 16).
# w128 blob (lane width 128):
W128_SE1 = 0      # (16, 128)  state encoder L1 (+ se_b1 row, +const-1 col 64)
W128_SE2 = 16     # (128, 128) state encoder L2 (+ se_b2 in row 64)
W128_PE1 = 144    # (32, 128)  path encoder L1 (+ pe_b1 in row 30)
W128_PE2 = 176    # (128, 128) path encoder L2
W128_DC2 = 304    # (256, 128) decoder L2
W128_OL = 560     # (64, 128)  LSTM output layer (cols 0:3 real)
W128_ROWS = 624
# w256 blob (lane width 256):
W256_DC1 = 0      # (256, 256) decoder L1
W256_L0 = 256     # (144, 256) LSTM layer-0 fused gates [i|g|o|pad], bias in row 134
W256_L1 = 400     # (64, 256)  LSTM layer-1 fused gates [i|g|o|pad]
W256_ROWS = 464
# bias blob rows (f32, (8, 256)):
B_PE2, B_DC1, B_DC2, B_L1, B_OL = 0, 1, 2, 3, 4


# ----------------------------------------------------------------------------
# Kernel
# ----------------------------------------------------------------------------
def control_kernel(state_ref, path_ref, w128_ref, w256_ref, bias_ref, out_ref):
    H = LSTM_HIDDEN
    xs = state_ref[...]            # (B, 16) f32: state (6) | 1.0 | zeros
    xp = path_ref[...]             # (B, 32) f32: path (30) | 1.0 | zero

    def mm(x, w):
        # bf16 x bf16 on the MXU, f32 accumulate
        return jnp.dot(x.astype(BF16), w, preferred_element_type=F32)

    def relu(x):
        return jnp.maximum(x, 0.0)

    def sig_fast(x):               # internal gates: EUP reciprocal
        return pl.reciprocal(1.0 + jnp.exp(-x), approx=True)

    def sig_exact(x):              # output head: stays strictly in [0, 1]
        return 1.0 / (1.0 + jnp.exp(-x))

    # --- state encoder: 6 -> 64 -> 128 (biases folded via const-1 lane/col) ---
    s1 = relu(mm(xs, w128_ref[W128_SE1:W128_SE1 + 16, :]))              # (B,128), lane64==1
    state_feat = relu(mm(s1, w128_ref[W128_SE2:W128_SE2 + 128, :]))     # (B,128)

    # --- path encoder: 30 -> 128 -> 128 ---
    p1 = relu(mm(xp, w128_ref[W128_PE1:W128_PE1 + 32, :]))              # (B,128)
    path_feat = relu(mm(p1, w128_ref[W128_PE2:W128_PE2 + 128, :])
                     + bias_ref[B_PE2:B_PE2 + 1, 0:128])                # (B,128)

    # --- control decoder: [128|128] -> 256 -> 128 (single fused dc_w1 matmul) ---
    dcat = jnp.concatenate([state_feat, path_feat], axis=1)             # (B,256)
    d1 = relu(mm(dcat, w256_ref[W256_DC1:W256_DC1 + 256, :])
              + bias_ref[B_DC1:B_DC1 + 1, :])                           # (B,256)
    d2 = relu(mm(d1, w128_ref[W128_DC2:W128_DC2 + 256, :])
              + bias_ref[B_DC2:B_DC2 + 1, 0:128])                       # (B,128)

    # --- refinement LSTM layer 0: one fused gate matmul (dc_w3/bias folded) ---
    lstm_in = jnp.concatenate([d2, xs], axis=1)                         # (B,144)
    z0 = mm(lstm_in, w256_ref[W256_L0:W256_L0 + 144, :])                # (B,256) [i|g|o|pad]
    i0 = sig_fast(z0[:, 0:H])
    g0 = jnp.tanh(z0[:, H:2 * H])
    o0 = sig_fast(z0[:, 2 * H:3 * H])
    h0 = o0 * jnp.tanh(i0 * g0)                                         # (B,64)

    # --- refinement LSTM layer 1 ---
    z1 = mm(h0, w256_ref[W256_L1:W256_L1 + 64, :]) + bias_ref[B_L1:B_L1 + 1, :]
    i1 = sig_fast(z1[:, 0:H])
    g1 = jnp.tanh(z1[:, H:2 * H])
    o1 = sig_fast(z1[:, 2 * H:3 * H])
    h1 = o1 * jnp.tanh(i1 * g1)                                         # (B,64)

    # --- output head: tanh on lane 0 (steering), exact sigmoid elsewhere ---
    refined = mm(h1, w128_ref[W128_OL:W128_OL + 64, :]) + bias_ref[B_OL:B_OL + 1, 0:128]
    lane = jax.lax.broadcasted_iota(jnp.int32, refined.shape, 1)
    out_ref[...] = jnp.where(lane == 0, jnp.tanh(refined), sig_exact(refined))


# ----------------------------------------------------------------------------
# Parameters: PyTorch-equivalent synthetic init + offline kernel-param packing
# ----------------------------------------------------------------------------
def init_params(key):
    """Synthetic params in the PyTorch-equivalent (in, out) layout."""
    def nxt():
        nonlocal key
        key, sub = jax.random.split(key)
        return sub

    def w(shape, scale=0.1):
        return (scale * jax.random.normal(nxt(), shape)).astype(F32)

    def b(n):
        return (0.05 * jax.random.normal(nxt(), (1, n))).astype(F32)

    p = {}
    p["se_w1"], p["se_b1"] = w((6, 64)), b(64)
    p["se_w2"], p["se_b2"] = w((64, 128)), b(128)
    p["pe_w1"], p["pe_b1"] = w((30, 128)), b(128)
    p["pe_w2"], p["pe_b2"] = w((128, 128)), b(128)
    p["dc_w1"], p["dc_b1"] = w((256, HIDDEN_DIM)), b(HIDDEN_DIM)
    p["dc_w2"], p["dc_b2"] = w((HIDDEN_DIM, HIDDEN_DIM // 2)), b(HIDDEN_DIM // 2)
    p["dc_w3"], p["dc_b3"] = w((HIDDEN_DIM // 2, 3)), b(3)
    # LSTM(input=9, hidden=64, layers=2); bias = b_ih + b_hh combined; gate order i,f,g,o
    p["l0_wih"] = w((9, 4 * LSTM_HIDDEN))
    p["l0_b"] = b(4 * LSTM_HIDDEN)
    p["l1_wih"] = w((LSTM_HIDDEN, 4 * LSTM_HIDDEN))
    p["l1_b"] = b(4 * LSTM_HIDDEN)
    p["ol_w"], p["ol_b"] = w((LSTM_HIDDEN, 3)), b(3)
    return p


def prepare_kernel_params(p):
    """Fold / split / pad / cast the PyTorch-layout params into 3 packed blobs."""
    H = LSTM_HIDDEN

    def igo(w4h):
        # drop forget gate (zero initial cell state), repack columns as [i|g|o]
        return jnp.concatenate([w4h[:, 0:H], w4h[:, 2 * H:3 * H], w4h[:, 3 * H:4 * H]], axis=1)

    # ---- w128 blob (lane width 128) ----
    se_w1 = jnp.zeros((16, 128), F32)
    se_w1 = se_w1.at[0:6, 0:64].set(p["se_w1"])
    se_w1 = se_w1.at[6, 0:64].set(p["se_b1"][0])     # bias via const-1 state lane 6
    se_w1 = se_w1.at[6, 64].set(1.0)                 # feeds const-1 into s1 lane 64

    se_w2 = jnp.zeros((128, 128), F32)
    se_w2 = se_w2.at[0:64, :].set(p["se_w2"])
    se_w2 = se_w2.at[64, :].set(p["se_b2"][0])       # bias via s1 lane 64 == 1

    pe_w1 = jnp.zeros((32, 128), F32)
    pe_w1 = pe_w1.at[0:30, :].set(p["pe_w1"])
    pe_w1 = pe_w1.at[30, :].set(p["pe_b1"][0])       # bias via const-1 path lane 30

    ol_w = jnp.zeros((64, 128), F32)
    ol_w = ol_w.at[:, 0:3].set(p["ol_w"])

    w128 = jnp.concatenate(
        [se_w1, se_w2, pe_w1, p["pe_w2"], p["dc_w2"], ol_w], axis=0).astype(BF16)
    assert w128.shape == (W128_ROWS, 128)

    # ---- w256 blob (lane width 256) ----
    w_rc = p["l0_wih"][0:3]                          # rows multiplying raw_control
    w_st = p["l0_wih"][3:9]                          # rows multiplying current_state
    w_fold = p["dc_w3"] @ w_rc                       # dc_w3 folded (no activation between)
    b_fold = p["l0_b"] + p["dc_b3"] @ w_rc

    l0_w = jnp.zeros((144, 256), F32)
    l0_w = l0_w.at[0:128, 0:3 * H].set(igo(w_fold))      # d2 part
    l0_w = l0_w.at[128:134, 0:3 * H].set(igo(w_st))      # state part
    l0_w = l0_w.at[134, 0:3 * H].set(igo(b_fold)[0])     # bias via const-1 state lane 6

    l1_w = jnp.zeros((64, 256), F32)
    l1_w = l1_w.at[:, 0:3 * H].set(igo(p["l1_wih"]))

    w256 = jnp.concatenate([p["dc_w1"], l0_w, l1_w], axis=0).astype(BF16)
    assert w256.shape == (W256_ROWS, 256)

    # ---- bias blob (f32, one 8 KB DMA for the 5 remaining biases) ----
    bias = jnp.zeros((8, 256), F32)
    bias = bias.at[B_PE2, 0:128].set(p["pe_b2"][0])
    bias = bias.at[B_DC1, :].set(p["dc_b1"][0])
    bias = bias.at[B_DC2, 0:128].set(p["dc_b2"][0])
    bias = bias.at[B_L1, 0:3 * H].set(igo(p["l1_b"])[0])
    bias = bias.at[B_OL, 0:3].set(p["ol_b"][0])

    return {"w128": w128, "w256": w256, "bias": bias}


# ----------------------------------------------------------------------------
# Wrapper
# ----------------------------------------------------------------------------
@jax.jit
def control_module_forward(current_state, planned_path, kparams):
    B = current_state.shape[0]
    B_pad = max(16, ((B + 15) // 16) * 16)           # bf16 sublane packing (16 rows/vreg)

    ones = jnp.ones((B, 1), F32)
    state_in = jnp.concatenate(
        [current_state.astype(F32), ones, jnp.zeros((B, 9), F32)], axis=1)        # (B, 16)
    path_flat = planned_path[:, :10, :].reshape(B, 30).astype(F32)
    path_in = jnp.concatenate([path_flat, ones, jnp.zeros((B, 1), F32)], axis=1)  # (B, 32)

    state_in = jnp.pad(state_in, ((0, B_pad - B), (0, 0)))
    path_in = jnp.pad(path_in, ((0, B_pad - B), (0, 0)))

    operands = [state_in, path_in, kparams["w128"], kparams["w256"], kparams["bias"]]

    out_pad = pl.pallas_call(
        control_kernel,
        out_shape=jax.ShapeDtypeStruct((B_pad, 128), F32),
        in_specs=[pl.BlockSpec(memory_space=pltpu.MemorySpace.VMEM)] * len(operands),
        out_specs=pl.BlockSpec(memory_space=pltpu.MemorySpace.VMEM),
    )(*operands)

    control = out_pad[:B, :3]
    return {
        "steering": control[:, 0:1],
        "throttle": control[:, 1:2],
        "brake": control[:, 2:3],
        "control": control,
    }


# ----------------------------------------------------------------------------
# Pure-JAX f32 reference (PyTorch semantics, zero initial LSTM state)
# ----------------------------------------------------------------------------
def reference_forward(p, current_state, planned_path):
    H = LSTM_HIDDEN
    relu = lambda x: jnp.maximum(x, 0.0)
    sig = lambda x: 1.0 / (1.0 + jnp.exp(-x))
    B = current_state.shape[0]
    s1 = relu(current_state @ p["se_w1"] + p["se_b1"])
    sf = relu(s1 @ p["se_w2"] + p["se_b2"])
    pin = planned_path[:, :10, :].reshape(B, 30)
    p1 = relu(pin @ p["pe_w1"] + p["pe_b1"])
    pf = relu(p1 @ p["pe_w2"] + p["pe_b2"])
    cat = jnp.concatenate([sf, pf], axis=1)
    d1 = relu(cat @ p["dc_w1"] + p["dc_b1"])
    d2 = relu(d1 @ p["dc_w2"] + p["dc_b2"])
    raw = d2 @ p["dc_w3"] + p["dc_b3"]
    lstm_in = jnp.concatenate([raw, current_state], axis=1)

    def cell(x, wih, b):
        z = x @ wih + b
        i = sig(z[:, 0:H]); g = jnp.tanh(z[:, 2 * H:3 * H]); o = sig(z[:, 3 * H:4 * H])
        return o * jnp.tanh(i * g)          # c_prev == 0

    h0 = cell(lstm_in, p["l0_wih"], p["l0_b"])
    h1 = cell(h0, p["l1_wih"], p["l1_b"])
    refined = h1 @ p["ol_w"] + p["ol_b"]
    return jnp.concatenate(
        [jnp.tanh(refined[:, 0:1]), sig(refined[:, 1:2]), sig(refined[:, 2:3])], axis=1)


if __name__ == "__main__":
    key = jax.random.PRNGKey(0)
    k_param, k_state, k_path = jax.random.split(key, 3)

    params = init_params(k_param)
    kparams = prepare_kernel_params(params)

    B = 4
    current_state = jax.random.normal(k_state, (B, 6), dtype=F32)     # (B, 6)
    planned_path = jax.random.normal(k_path, (B, 12, 3), dtype=F32)   # (B, 12 waypoints, 3)

    out = control_module_forward(current_state, planned_path, kparams)
    jax.block_until_ready(out)

    assert out["control"].shape == (B, 3)
    assert out["steering"].shape == (B, 1)
    assert out["throttle"].shape == (B, 1)
    assert out["brake"].shape == (B, 1)
    assert bool(jnp.all(jnp.isfinite(out["control"])))
    assert bool(jnp.all((out["throttle"] >= 0) & (out["throttle"] <= 1)))
    assert bool(jnp.all((out["brake"] >= 0) & (out["brake"] <= 1)))
    assert bool(jnp.all(jnp.abs(out["steering"]) <= 1))

    ref = reference_forward(params, current_state, planned_path)
    max_err = float(jnp.max(jnp.abs(out["control"] - ref)))
    assert max_err < 2e-2, f"kernel vs reference max abs err {max_err}"

    print("KERNEL_OK")
</pallas_src>

<mosaic_0001>
module attributes {stable_mosaic.version = 11 : i64} {
  func.func @control_kernel(%arg0: memref<16x16xf32, #tpu.memory_space<vmem>>, %arg1: memref<16x32xf32, #tpu.memory_space<vmem>>, %arg2: memref<624x128xbf16, #tpu.memory_space<vmem>>, %arg3: memref<464x256xbf16, #tpu.memory_space<vmem>>, %arg4: memref<8x256xf32, #tpu.memory_space<vmem>>, %arg5: memref<16x128xf32, #tpu.memory_space<vmem>>) attributes {dimension_semantics = [], scalar_prefetch = 0 : i64, scratch_operands = 0 : i64, tpu.core_type = #tpu.core_type<tc>} {
    %c0 = arith.constant 0 : index
    %c0_0 = arith.constant 0 : index
    %0 = vector.load %arg0[%c0, %c0_0] : memref<16x16xf32, #tpu.memory_space<vmem>>, vector<16x16xf32>
    %c0_1 = arith.constant 0 : index
    %c0_2 = arith.constant 0 : index
    %1 = vector.load %arg1[%c0_1, %c0_2] : memref<16x32xf32, #tpu.memory_space<vmem>>, vector<16x32xf32>
    %c0_3 = arith.constant 0 : index
    %c0_4 = arith.constant 0 : index
    %2 = vector.load %arg2[%c0_3, %c0_4] : memref<624x128xbf16, #tpu.memory_space<vmem>>, vector<16x128xbf16>
    %3 = arith.truncf %0 : vector<16x16xf32> to vector<16x16xbf16>
    %cst = arith.constant dense<0.000000e+00> : vector<16x128xf32>
    %4 = tpu.matmul %3, %2, %cst {dimension_numbers = #tpu.dot_dimension_numbers<[1], [0], [0], [1], [0, 0, 1, 1], [], []>} : vector<16x16xbf16>, vector<16x128xbf16>, vector<16x128xf32> -> vector<16x128xf32>
    %cst_5 = arith.constant 0.000000e+00 : f32
    %5 = vector.broadcast %cst_5 : f32 to vector<16x128xf32>
    %6 = arith.maximumf %4, %5 : vector<16x128xf32>
    %c16 = arith.constant 16 : index
    %c0_6 = arith.constant 0 : index
    %7 = vector.load %arg2[%c16, %c0_6] : memref<624x128xbf16, #tpu.memory_space<vmem>>, vector<128x128xbf16>
    %8 = arith.truncf %6 : vector<16x128xf32> to vector<16x128xbf16>
    %cst_7 = arith.constant dense<0.000000e+00> : vector<16x128xf32>
    %9 = tpu.matmul %8, %7, %cst_7 {dimension_numbers = #tpu.dot_dimension_numbers<[1], [0], [0], [1], [0, 0, 1, 1], [], []>} : vector<16x128xbf16>, vector<128x128xbf16>, vector<16x128xf32> -> vector<16x128xf32>
    %cst_8 = arith.constant 0.000000e+00 : f32
    %10 = vector.broadcast %cst_8 : f32 to vector<16x128xf32>
    %11 = arith.maximumf %9, %10 : vector<16x128xf32>
    %c144 = arith.constant 144 : index
    %c0_9 = arith.constant 0 : index
    %12 = vector.load %arg2[%c144, %c0_9] : memref<624x128xbf16, #tpu.memory_space<vmem>>, vector<32x128xbf16>
    %13 = arith.truncf %1 : vector<16x32xf32> to vector<16x32xbf16>
    %cst_10 = arith.constant dense<0.000000e+00> : vector<16x128xf32>
    %14 = tpu.matmul %13, %12, %cst_10 {dimension_numbers = #tpu.dot_dimension_numbers<[1], [0], [0], [1], [0, 0, 1, 1], [], []>} : vector<16x32xbf16>, vector<32x128xbf16>, vector<16x128xf32> -> vector<16x128xf32>
    %cst_11 = arith.constant 0.000000e+00 : f32
    %15 = vector.broadcast %cst_11 : f32 to vector<16x128xf32>
    %16 = arith.maximumf %14, %15 : vector<16x128xf32>
    %c176 = arith.constant 176 : index
    %c0_12 = arith.constant 0 : index
    %17 = vector.load %arg2[%c176, %c0_12] : memref<624x128xbf16, #tpu.memory_space<vmem>>, vector<128x128xbf16>
    %18 = arith.truncf %16 : vector<16x128xf32> to vector<16x128xbf16>
    %cst_13 = arith.constant dense<0.000000e+00> : vector<16x128xf32>
    %19 = tpu.matmul %18, %17, %cst_13 {dimension_numbers = #tpu.dot_dimension_numbers<[1], [0], [0], [1], [0, 0, 1, 1], [], []>} : vector<16x128xbf16>, vector<128x128xbf16>, vector<16x128xf32> -> vector<16x128xf32>
    %c0_14 = arith.constant 0 : index
    %c0_15 = arith.constant 0 : index
    %20 = vector.load %arg4[%c0_14, %c0_15] : memref<8x256xf32, #tpu.memory_space<vmem>>, vector<1x128xf32>
    %21 = vector.broadcast %20 : vector<1x128xf32> to vector<16x128xf32>
    %22 = arith.addf %19, %21 : vector<16x128xf32>
    %cst_16 = arith.constant 0.000000e+00 : f32
    %23 = vector.broadcast %cst_16 : f32 to vector<16x128xf32>
    %24 = arith.maximumf %22, %23 : vector<16x128xf32>
    %25 = tpu.concatenate %11, %24 in 1 : vector<16x128xf32>, vector<16x128xf32> -> vector<16x256xf32>
    %c0_17 = arith.constant 0 : index
    %c0_18 = arith.constant 0 : index
    %26 = vector.load %arg3[%c0_17, %c0_18] : memref<464x256xbf16, #tpu.memory_space<vmem>>, vector<256x256xbf16>
    %27 = arith.truncf %25 : vector<16x256xf32> to vector<16x256xbf16>
    %cst_19 = arith.constant dense<0.000000e+00> : vector<16x256xf32>
    %28 = tpu.matmul %27, %26, %cst_19 {dimension_numbers = #tpu.dot_dimension_numbers<[1], [0], [0], [1], [0, 0, 1, 1], [], []>} : vector<16x256xbf16>, vector<256x256xbf16>, vector<16x256xf32> -> vector<16x256xf32>
    %c1 = arith.constant 1 : index
    %c0_20 = arith.constant 0 : index
    %29 = vector.load %arg4[%c1, %c0_20] : memref<8x256xf32, #tpu.memory_space<vmem>>, vector<1x256xf32>
    %30 = vector.broadcast %29 : vector<1x256xf32> to vector<16x256xf32>
    %31 = arith.addf %28, %30 : vector<16x256xf32>
    %cst_21 = arith.constant 0.000000e+00 : f32
    %32 = vector.broadcast %cst_21 : f32 to vector<16x256xf32>
    %33 = arith.maximumf %31, %32 : vector<16x256xf32>
    %c304 = arith.constant 304 : index
    %c0_22 = arith.constant 0 : index
    %34 = vector.load %arg2[%c304, %c0_22] : memref<624x128xbf16, #tpu.memory_space<vmem>>, vector<256x128xbf16>
    %35 = arith.truncf %33 : vector<16x256xf32> to vector<16x256xbf16>
    %cst_23 = arith.constant dense<0.000000e+00> : vector<16x128xf32>
    %36 = tpu.matmul %35, %34, %cst_23 {dimension_numbers = #tpu.dot_dimension_numbers<[1], [0], [0], [1], [0, 0, 1, 1], [], []>} : vector<16x256xbf16>, vector<256x128xbf16>, vector<16x128xf32> -> vector<16x128xf32>
    %c2 = arith.constant 2 : index
    %c0_24 = arith.constant 0 : index
    %37 = vector.load %arg4[%c2, %c0_24] : memref<8x256xf32, #tpu.memory_space<vmem>>, vector<1x128xf32>
    %38 = vector.broadcast %37 : vector<1x128xf32> to vector<16x128xf32>
    %39 = arith.addf %36, %38 : vector<16x128xf32>
    %cst_25 = arith.constant 0.000000e+00 : f32
    %40 = vector.broadcast %cst_25 : f32 to vector<16x128xf32>
    %41 = arith.maximumf %39, %40 : vector<16x128xf32>
    %42 = tpu.concatenate %41, %0 in 1 : vector<16x128xf32>, vector<16x16xf32> -> vector<16x144xf32>
    %c256 = arith.constant 256 : index
    %c0_26 = arith.constant 0 : index
    %43 = vector.load %arg3[%c256, %c0_26] : memref<464x256xbf16, #tpu.memory_space<vmem>>, vector<144x256xbf16>
    %44 = arith.truncf %42 : vector<16x144xf32> to vector<16x144xbf16>
    %cst_27 = arith.constant dense<0.000000e+00> : vector<16x256xf32>
    %45 = tpu.matmul %44, %43, %cst_27 {dimension_numbers = #tpu.dot_dimension_numbers<[1], [0], [0], [1], [0, 0, 1, 1], [], []>} : vector<16x144xbf16>, vector<144x256xbf16>, vector<16x256xf32> -> vector<16x256xf32>
    %46 = vector.extract_strided_slice %45 {offsets = [0, 0], sizes = [16, 64], strides = [1, 1]} : vector<16x256xf32> to vector<16x64xf32>
    %cst_28 = arith.constant 0.000000e+00 : f32
    %47 = vector.broadcast %cst_28 : f32 to vector<16x64xf32>
    %48 = arith.subf %47, %46 : vector<16x64xf32>
    %49 = math.exp %48 : vector<16x64xf32>
    %cst_29 = arith.constant 1.000000e+00 : f32
    %50 = vector.broadcast %cst_29 : f32 to vector<16x64xf32>
    %51 = arith.addf %50, %49 : vector<16x64xf32>
    %52 = tpu.reciprocal %51 {approx = true} : vector<16x64xf32> -> vector<16x64xf32>
    %53 = vector.extract_strided_slice %45 {offsets = [0, 64], sizes = [16, 64], strides = [1, 1]} : vector<16x256xf32> to vector<16x64xf32>
    %54 = math.tanh %53 : vector<16x64xf32>
    %55 = vector.extract_strided_slice %45 {offsets = [0, 128], sizes = [16, 64], strides = [1, 1]} : vector<16x256xf32> to vector<16x64xf32>
    %cst_30 = arith.constant 0.000000e+00 : f32
    %56 = vector.broadcast %cst_30 : f32 to vector<16x64xf32>
    %57 = arith.subf %56, %55 : vector<16x64xf32>
    %58 = math.exp %57 : vector<16x64xf32>
    %cst_31 = arith.constant 1.000000e+00 : f32
    %59 = vector.broadcast %cst_31 : f32 to vector<16x64xf32>
    %60 = arith.addf %59, %58 : vector<16x64xf32>
    %61 = tpu.reciprocal %60 {approx = true} : vector<16x64xf32> -> vector<16x64xf32>
    %62 = arith.mulf %52, %54 : vector<16x64xf32>
    %63 = math.tanh %62 : vector<16x64xf32>
    %64 = arith.mulf %61, %63 : vector<16x64xf32>
    %c400 = arith.constant 400 : index
    %c0_32 = arith.constant 0 : index
    %65 = vector.load %arg3[%c400, %c0_32] : memref<464x256xbf16, #tpu.memory_space<vmem>>, vector<64x256xbf16>
    %66 = arith.truncf %64 : vector<16x64xf32> to vector<16x64xbf16>
    %cst_33 = arith.constant dense<0.000000e+00> : vector<16x256xf32>
    %67 = tpu.matmul %66, %65, %cst_33 {dimension_numbers = #tpu.dot_dimension_numbers<[1], [0], [0], [1], [0, 0, 1, 1], [], []>} : vector<16x64xbf16>, vector<64x256xbf16>, vector<16x256xf32> -> vector<16x256xf32>
    %c3 = arith.constant 3 : index
    %c0_34 = arith.constant 0 : index
    %68 = vector.load %arg4[%c3, %c0_34] : memref<8x256xf32, #tpu.memory_space<vmem>>, vector<1x256xf32>
    %69 = vector.broadcast %68 : vector<1x256xf32> to vector<16x256xf32>
    %70 = arith.addf %67, %69 : vector<16x256xf32>
    %71 = vector.extract_strided_slice %70 {offsets = [0, 0], sizes = [16, 64], strides = [1, 1]} : vector<16x256xf32> to vector<16x64xf32>
    %cst_35 = arith.constant 0.000000e+00 : f32
    %72 = vector.broadcast %cst_35 : f32 to vector<16x64xf32>
    %73 = arith.subf %72, %71 : vector<16x64xf32>
    %74 = math.exp %73 : vector<16x64xf32>
    %cst_36 = arith.constant 1.000000e+00 : f32
    %75 = vector.broadcast %cst_36 : f32 to vector<16x64xf32>
    %76 = arith.addf %75, %74 : vector<16x64xf32>
    %77 = tpu.reciprocal %76 {approx = true} : vector<16x64xf32> -> vector<16x64xf32>
    %78 = vector.extract_strided_slice %70 {offsets = [0, 64], sizes = [16, 64], strides = [1, 1]} : vector<16x256xf32> to vector<16x64xf32>
    %79 = math.tanh %78 : vector<16x64xf32>
    %80 = vector.extract_strided_slice %70 {offsets = [0, 128], sizes = [16, 64], strides = [1, 1]} : vector<16x256xf32> to vector<16x64xf32>
    %cst_37 = arith.constant 0.000000e+00 : f32
    %81 = vector.broadcast %cst_37 : f32 to vector<16x64xf32>
    %82 = arith.subf %81, %80 : vector<16x64xf32>
    %83 = math.exp %82 : vector<16x64xf32>
    %cst_38 = arith.constant 1.000000e+00 : f32
    %84 = vector.broadcast %cst_38 : f32 to vector<16x64xf32>
    %85 = arith.addf %84, %83 : vector<16x64xf32>
    %86 = tpu.reciprocal %85 {approx = true} : vector<16x64xf32> -> vector<16x64xf32>
    %87 = arith.mulf %77, %79 : vector<16x64xf32>
    %88 = math.tanh %87 : vector<16x64xf32>
    %89 = arith.mulf %86, %88 : vector<16x64xf32>
    %c560 = arith.constant 560 : index
    %c0_39 = arith.constant 0 : index
    %90 = vector.load %arg2[%c560, %c0_39] : memref<624x128xbf16, #tpu.memory_space<vmem>>, vector<64x128xbf16>
    %91 = arith.truncf %89 : vector<16x64xf32> to vector<16x64xbf16>
    %cst_40 = arith.constant dense<0.000000e+00> : vector<16x128xf32>
    %92 = tpu.matmul %91, %90, %cst_40 {dimension_numbers = #tpu.dot_dimension_numbers<[1], [0], [0], [1], [0, 0, 1, 1], [], []>} : vector<16x64xbf16>, vector<64x128xbf16>, vector<16x128xf32> -> vector<16x128xf32>
    %c4 = arith.constant 4 : index
    %c0_41 = arith.constant 0 : index
    %93 = vector.load %arg4[%c4, %c0_41] : memref<8x256xf32, #tpu.memory_space<vmem>>, vector<1x128xf32>
    %94 = vector.broadcast %93 : vector<1x128xf32> to vector<16x128xf32>
    %95 = arith.addf %92, %94 : vector<16x128xf32>
    %96 = tpu.iota {dimensions = array<i32: 1>} : vector<16x128xi32>
    %c0_i32 = arith.constant 0 : i32
    %97 = vector.broadcast %c0_i32 : i32 to vector<16x128xi32>
    %98 = arith.cmpi eq, %96, %97 : vector<16x128xi32>
    %99 = math.tanh %95 : vector<16x128xf32>
    %cst_42 = arith.constant 0.000000e+00 : f32
    %100 = vector.broadcast %cst_42 : f32 to vector<16x128xf32>
    %101 = arith.subf %100, %95 : vector<16x128xf32>
    %102 = math.exp %101 : vector<16x128xf32>
    %cst_43 = arith.constant 1.000000e+00 : f32
    %103 = vector.broadcast %cst_43 : f32 to vector<16x128xf32>
    %104 = arith.addf %103, %102 : vector<16x128xf32>
    %cst_44 = arith.constant 1.000000e+00 : f32
    %105 = vector.broadcast %cst_44 : f32 to vector<16x128xf32>
    %106 = arith.divf %105, %104 : vector<16x128xf32>
    %107 = arith.select %98, %99, %106 : vector<16x128xi1>, vector<16x128xf32>
    %c0_45 = arith.constant 0 : index
    %c0_46 = arith.constant 0 : index
    %108 = vector.load %arg5[%c0_45, %c0_46] : memref<16x128xf32, #tpu.memory_space<vmem>>, vector<16x128xf32>
    tpu.vector_store %arg5[%c0_45, %c0_46], %107 {strides = array<i32>} : memref<16x128xf32, #tpu.memory_space<vmem>>, vector<16x128xf32>,
    return
  }
}

</mosaic_0001>

<llo_original>
// kernel: control_module_forward.1
$region0: #{control_module_forward.1}
  #allocation0 [shape = 'u32[]', space=smem, size = 0x4, offset = 0x4, fixed_abs, tag = 'smem constant byte address 0x4 - core index']
  #allocation1 [shape = 'u32[144,128]{1,0:T(1,128)}', space=vmem, size = 0x12000, scoped, tag = 'internal scratch']
  %s0 = inlined_call_operand.vmem [shape: f32[16,16], index: 0, kind: input, shape index: {}]
  %s1 = inlined_call_operand.vmem [shape: f32[16,32], index: 1, kind: input, shape index: {}]
  %s2 = inlined_call_operand.hbm [shape: bf16[624,128], index: 2, kind: input, shape index: {}]
  %s3 = inlined_call_operand.hbm [shape: bf16[464,256], index: 3, kind: input, shape index: {}]
  %s4 = inlined_call_operand.vmem [shape: f32[8,256], index: 4, kind: input, shape index: {}]
  %s5 = inlined_call_operand.vmem [shape: f32[16,128], index: 5, kind: output, shape index: {}]
  %s6 = sld [smem:[#allocation0]]
  $region38: #{control_module_forward.1} parent=0
    _
  %s8 = ssub.s32 1, %s6
  %s9 = scalar_select 0, %s8, %s6
  $region1: #{control_module_forward.1} parent=0
    #allocation2 [shape = 'u8[159744]{0}', space=vmem, size = 0x27000, scoped, tag = 'input window, operand 2, single buffered']
    #allocation3 [shape = 's32[1]{0}', space=sflag, size = 0x4, scoped, tag = 'scoped memory for control_module_forward.1']
    #allocation4 [shape = 'u8[237568]{0}', space=vmem, size = 0x3a000, scoped, tag = 'input window, operand 3, single buffered']
    #allocation5 [shape = 's32[1]{0}', space=sflag, size = 0x4, scoped, tag = 'scoped memory for control_module_forward.1']
    %10 = vsyncpa [#allocation3], 0
    %11 = vsyncpa [#allocation5], 0
    // Predicated region
    $region2: #{control_module_forward.1} parent=1 // pred_check
      _
    $region3: #{control_module_forward.1} parent=1 // pred_check_branch
      %13 = sbr.rel (0) target = $region5
    $region4: #{control_module_forward.1} parent=1 // pred_region
      _
    $region5: #{control_module_forward.1} parent=1 // pred_fallthru
      _
    // Predicated region
    $region6: #{control_module_forward.1} parent=1 // pred_check
      _
    $region7: #{control_module_forward.1} parent=1 // pred_check_branch
      %15 = sbr.rel (0) target = $region9
    $region8: #{control_module_forward.1} parent=1 // pred_region
      _
    $region9: #{control_module_forward.1} parent=1 // pred_fallthru
      _
    // Predicated region
    $region10: #{control_module_forward.1} parent=1 // pred_check
      _
    $region11: #{control_module_forward.1} parent=1 // pred_check_branch
      %17 = sbr.rel (0) target = $region13
    $region12: #{control_module_forward.1} parent=1 // pred_region
      %s19 = ssub.s32 4992, 4992
      %20 = vsyncadd [#allocation3], %s19
      %s21 = sshll.u32 [#allocation2], 4
      %s22 = int_to_ptr.vmem [resolvable:$true] %s21
      %27 = dma.hbm_to_vmem [thread:$0]  %s2, 4992, %s22, [#allocation3], 64, 64, 4
    $region13: #{control_module_forward.1} parent=1 // pred_fallthru
      _
    // Predicated region
    $region14: #{control_module_forward.1} parent=1 // pred_check
      _
    $region15: #{control_module_forward.1} parent=1 // pred_check_branch
      %29 = sbr.rel (0) target = $region17
    $region16: #{control_module_forward.1} parent=1 // pred_region
      %s31 = ssub.s32 7424, 7424
      %32 = vsyncadd [#allocation5], %s31
      %s33 = sshll.u32 [#allocation4], 4
      %s34 = int_to_ptr.vmem [resolvable:$true] %s33
      %39 = dma.hbm_to_vmem [thread:$0]  %s3, 7424, %s34, [#allocation5], 128, 128, 8
    $region17: #{control_module_forward.1} parent=1 // pred_fallthru
      _
    // Predicated region
    $region18: #{control_module_forward.1} parent=1 // pred_check
      _
    $region19: #{control_module_forward.1} parent=1 // pred_check_branch
      %41 = sbr.rel (0) target = $region21
    $region20: #{control_module_forward.1} parent=1 // pred_region
      _
    $region21: #{control_module_forward.1} parent=1 // pred_fallthru
      _
    // Predicated region
    $region22: #{control_module_forward.1} parent=1 // pred_check
      _
    $region23: #{control_module_forward.1} parent=1 // pred_check_branch
      %43 = sbr.rel (0) target = $region25
    $region24: #{control_module_forward.1} parent=1 // pred_region
      %44 = dma.done [#allocation3], 4992
    $region25: #{control_module_forward.1} parent=1 // pred_fallthru
      _
    // Predicated region
    $region26: #{control_module_forward.1} parent=1 // pred_check
      _
    $region27: #{control_module_forward.1} parent=1 // pred_check_branch
      %46 = sbr.rel (0) target = $region29
    $region28: #{control_module_forward.1} parent=1 // pred_region
      %47 = dma.done [#allocation5], 7424
    $region29: #{control_module_forward.1} parent=1 // pred_fallthru
      _
    %v49 = vld [vmem:[%s0] sm:$0xff]
    %v50 = vld [vmem:[%s0 + $0x8] sm:$0xff]
    %v51 = vld [vmem:[%s1] sm:$0xff]
    %v52 = vld [vmem:[%s1 + $0x8] sm:$0xff]
    %v53 = vld [vmem:[#allocation2] sm:$0xf]
    %v54 = vld [vmem:[#allocation2 + $0x4] sm:$0xf]
    %v55 = vpack.c.bf16 %v50, %v49
    %v58 = vunpack.c.l.b16 %v53
    %v59 = vunpack.c.l.b16 %v54
    %v60 = vpack.c.b16 %v59, %v58
    %vm62 = vcmask 130048
    %v64 = vsel %vm62, %v55, 0
    %66 = vmatprep.subr.bf16.mxu0 0
    %67 = vmatpush1.bf16.msra.mxu0 %v60
    %68 = vmatprep.subr.bf16.mxu0 0
    %69 = vmatpush1.bf16.msra.mxu0 0
    %70 = vmatprep.subr.bf16.mxu0 0
    %71 = vmatpush1.bf16.msra.mxu0 0
    %72 = vmatprep.subr.bf16.mxu0 0
    %73 = vmatpush1.bf16.msra.mxu0 0
    %74 = vmatprep.subr.bf16.mxu0 0
    %75 = vmatpush1.bf16.msra.mxu0 0
    %76 = vmatprep.subr.bf16.mxu0 0
    %77 = vmatpush1.bf16.msra.mxu0 0
    %78 = vmatprep.subr.bf16.mxu0 0
    %79 = vmatpush1.bf16.msra.mxu0 0
    %80 = vmatprep.subr.bf16.mxu0 0
    %81 = vmatpush1.bf16.msra.mxu0 0
    %82 = vmatprep.subr.bf16.mxu0 0
    %83 = vmatpush1.bf16.msra.mxu0 0
    %84 = vmatprep.subr.bf16.mxu0 0
    %85 = vmatpush1.bf16.msra.mxu0 0
    %86 = vmatprep.subr.bf16.mxu0 0
    %87 = vmatpush1.bf16.msra.mxu0 0
    %88 = vmatprep.subr.bf16.mxu0 0
    %89 = vmatpush1.bf16.msra.mxu0 0
    %90 = vmatprep.subr.bf16.mxu0 0
    %91 = vmatpush1.bf16.msra.mxu0 0
    %92 = vmatprep.subr.bf16.mxu0 0
    %93 = vmatpush1.bf16.msra.mxu0 0
    %94 = vmatprep.subr.bf16.mxu0 0
    %95 = vmatpush1.bf16.msra.mxu0 0
    %96 = vmatprep.subr.bf16.mxu0 0
    %97 = vmatpush1.bf16.msra.mxu0 0
    %98 = vmatprep.mubr.bf16.mxu0 0
    %99 = vmatmul.mubr.bf16.gmra.mrb[0].mxu0 %v64
    %v100 = vpop.f32.mrb[0].mxu0
    %v101 = vadd.f32 0.0, %v100
    %v102 = vpop.f32.mrb[0].mxu0
    %v103 = vpop.f32.mrb[0].mxu0
    %v104 = vadd.f32 0.0, %v103
    %v105 = vpop.f32.mrb[0].mxu0
    %106 = vdwg.mxu0
    %v107 = vmax.f32 %v101, 0.0
    %v108 = vmax.f32 %v104, 0.0
    %v109 = vld [vmem:[#allocation2 + $0x8] sm:$0xf]
    %v110 = vld [vmem:[#allocation2 + $0xc] sm:$0xf]
    %v111 = vld [vmem:[#allocation2 + $0x10] sm:$0xf]
    %v112 = vld [vmem:[#allocation2 + $0x14] sm:$0xf]
    %v113 = vld [vmem:[#allocation2 + $0x18] sm:$0xf]
    %v114 = vld [vmem:[#allocation2 + $0x1c] sm:$0xf]
    %v115 = vld [vmem:[#allocation2 + $0x20] sm:$0xf]
    %v116 = vld [vmem:[#allocation2 + $0x24] sm:$0xf]
    %v117 = vld [vmem:[#allocation2 + $0x28] sm:$0xf]
    %v118 = vld [vmem:[#allocation2 + $0x2c] sm:$0xf]
    %v119 = vld [vmem:[#allocation2 + $0x30] sm:$0xf]
    %v120 = vld [vmem:[#allocation2 + $0x34] sm:$0xf]
    %v121 = vld [vmem:[#allocation2 + $0x38] sm:$0xf]
    %v122 = vld [vmem:[#allocation2 + $0x3c] sm:$0xf]
    %v123 = vld [vmem:[#allocation2 + $0x40] sm:$0xf]
    %v124 = vld [vmem:[#allocation2 + $0x44] sm:$0xf]
    %v125 = vpack.c.bf16 %v108, %v107
    %v142 = vunpack.c.l.b16 %v109
    %v143 = vunpack.c.l.b16 %v110
    %v144 = vunpack.c.l.b16 %v111
    %v145 = vunpack.c.l.b16 %v112
    %v146 = vunpack.c.l.b16 %v113
    %v147 = vunpack.c.l.b16 %v114
    %v148 = vunpack.c.l.b16 %v115
    %v149 = vunpack.c.l.b16 %v116
    %v150 = vunpack.c.l.b16 %v117
    %v151 = vunpack.c.l.b16 %v118
    %v152 = vunpack.c.l.b16 %v119
    %v153 = vunpack.c.l.b16 %v120
    %v154 = vunpack.c.l.b16 %v121
    %v155 = vunpack.c.l.b16 %v122
    %v156 = vunpack.c.l.b16 %v123
    %v157 = vunpack.c.l.b16 %v124
    %v158 = vpack.c.b16 %v143, %v142
    %v159 = vpack.c.b16 %v145, %v144
    %v160 = vpack.c.b16 %v147, %v146
    %v161 = vpack.c.b16 %v149, %v148
    %v162 = vpack.c.b16 %v151, %v150
    %v163 = vpack.c.b16 %v153, %v152
    %v164 = vpack.c.b16 %v155, %v154
    %v165 = vpack.c.b16 %v157, %v156
    %174 = vmatprep.subr.bf16.mxu0 0
    %175 = vmatpush1.bf16.msra.mxu0 %v158
    %176 = vmatprep.subr.bf16.mxu0 0
    %177 = vmatpush1.bf16.msra.mxu0 %v159
    %178 = vmatprep.subr.bf16.mxu0 0
    %179 = vmatpush1.bf16.msra.mxu0 %v160
    %180 = vmatprep.subr.bf16.mxu0 0
    %181 = vmatpush1.bf16.msra.mxu0 %v161
    %182 = vmatprep.subr.bf16.mxu0 0
    %183 = vmatpush1.bf16.msra.mxu0 %v162
    %184 = vmatprep.subr.bf16.mxu0 0
    %185 = vmatpush1.bf16.msra.mxu0 %v163
    %186 = vmatprep.subr.bf16.mxu0 0
    %187 = vmatpush1.bf16.msra.mxu0 %v164
    %188 = vmatprep.subr.bf16.mxu0 0
    %189 = vmatpush1.bf16.msra.mxu0 %v165
    %190 = vmatprep.subr.bf16.mxu0 0
    %191 = vmatpush1.bf16.msra.mxu0 0
    %192 = vmatprep.subr.bf16.mxu0 0
    %193 = vmatpush1.bf16.msra.mxu0 0
    %194 = vmatprep.subr.bf16.mxu0 0
    %195 = vmatpush1.bf16.msra.mxu0 0
    %196 = vmatprep.subr.bf16.mxu0 0
    %197 = vmatpush1.bf16.msra.mxu0 0
    %198 = vmatprep.subr.bf16.mxu0 0
    %199 = vmatpush1.bf16.msra.mxu0 0
    %200 = vmatprep.subr.bf16.mxu0 0
    %201 = vmatpush1.bf16.msra.mxu0 0
    %202 = vmatprep.subr.bf16.mxu0 0
    %203 = vmatpush1.bf16.msra.mxu0 0
    %204 = vmatprep.subr.bf16.mxu0 0
    %205 = vmatpush1.bf16.msra.mxu0 0
    %206 = vmatprep.mubr.bf16.mxu0 0
    %207 = vmatmul.mubr.bf16.gmra.mrb[0].mxu0 %v125
    %v208 = vpop.f32.mrb[0].mxu0
    %v209 = vadd.f32 0.0, %v208
    %v210 = vpop.f32.mrb[0].mxu0
    %v211 = vpop.f32.mrb[0].mxu0
    %v212 = vadd.f32 0.0, %v211
    %v213 = vpop.f32.mrb[0].mxu0
    %214 = vdwg.mxu0
    %v215 = vmax.f32 %v209, 0.0
    %v216 = vmax.f32 %v212, 0.0
    %v217 = vld [vmem:[#allocation2 + $0x48] sm:$0xf]
    %v218 = vld [vmem:[#allocation2 + $0x4c] sm:$0xf]
    %v219 = vld [vmem:[#allocation2 + $0x50] sm:$0xf]
    %v220 = vld [vmem:[#allocation2 + $0x54] sm:$0xf]
    %v221 = vpack.c.bf16 %v52, %v51
    %v226 = vunpack.c.l.b16 %v217
    %v227 = vunpack.c.l.b16 %v218
    %v228 = vunpack.c.l.b16 %v219
    %v229 = vunpack.c.l.b16 %v220
    %v230 = vpack.c.b16 %v227, %v226
    %v231 = vpack.c.b16 %v229, %v228
    %vm234 = vcmask 261120
    %v236 = vsel %vm234, %v221, 0
    %238 = vmatprep.subr.bf16.mxu0 0
    %239 = vmatpush1.bf16.msra.mxu0 %v230
    %240 = vmatprep.subr.bf16.mxu0 0
    %241 = vmatpush1.bf16.msra.mxu0 %v231
    %242 = vmatprep.subr.bf16.mxu0 0
    %243 = vmatpush1.bf16.msra.mxu0 0
    %244 = vmatprep.subr.bf16.mxu0 0
    %245 = vmatpush1.bf16.msra.mxu0 0
    %246 = vmatprep.subr.bf16.mxu0 0
    %247 = vmatpush1.bf16.msra.mxu0 0
    %248 = vmatprep.subr.bf16.mxu0 0
    %249 = vmatpush1.bf16.msra.mxu0 0
    %250 = vmatprep.subr.bf16.mxu0 0
    %251 = vmatpush1.bf16.msra.mxu0 0
    %252 = vmatprep.subr.bf16.mxu0 0
    %253 = vmatpush1.bf16.msra.mxu0 0
    %254 = vmatprep.subr.bf16.mxu0 0
    %255 = vmatpush1.bf16.msra.mxu0 0
    %256 = vmatprep.subr.bf16.mxu0 0
    %257 = vmatpush1.bf16.msra.mxu0 0
    %258 = vmatprep.subr.bf16.mxu0 0
    %259 = vmatpush1.bf16.msra.mxu0 0
    %260 = vmatprep.subr.bf16.mxu0 0
    %261 = vmatpush1.bf16.msra.mxu0 0
    %262 = vmatprep.subr.bf16.mxu0 0
    %263 = vmatpush1.bf16.msra.mxu0 0
    %264 = vmatprep.subr.bf16.mxu0 0
    %265 = vmatpush1.bf16.msra.mxu0 0
    %266 = vmatprep.subr.bf16.mxu0 0
    %267 = vmatpush1.bf16.msra.mxu0 0
    %268 = vmatprep.subr.bf16.mxu0 0
    %269 = vmatpush1.bf16.msra.mxu0 0
    %270 = vmatprep.mubr.bf16.mxu0 0
    %271 = vmatmul.mubr.bf16.gmra.mrb[0].mxu0 %v236
    %v272 = vpop.f32.mrb[0].mxu0
    %v273 = vadd.f32 0.0, %v272
    %v274 = vpop.f32.mrb[0].mxu0
    %v275 = vpop.f32.mrb[0].mxu0
    %v276 = vadd.f32 0.0, %v275
    %v277 = vpop.f32.mrb[0].mxu0
    %278 = vdwg.mxu0
    %v279 = vmax.f32 %v273, 0.0
    %v280 = vmax.f32 %v276, 0.0
    %v281 = vld [vmem:[#allocation2 + $0x58] sm:$0xf]
    %v282 = vld [vmem:[#allocation2 + $0x5c] sm:$0xf]
    %v283 = vld [vmem:[#allocation2 + $0x60] sm:$0xf]
    %v284 = vld [vmem:[#allocation2 + $0x64] sm:$0xf]
    %v285 = vld [vmem:[#allocation2 + $0x68] sm:$0xf]
    %v286 = vld [vmem:[#allocation2 + $0x6c] sm:$0xf]
    %v287 = vld [vmem:[#allocation2 + $0x70] sm:$0xf]
    %v288 = vld [vmem:[#allocation2 + $0x74] sm:$0xf]
    %v289 = vld [vmem:[#allocation2 + $0x78] sm:$0xf]
    %v290 = vld [vmem:[#allocation2 + $0x7c] sm:$0xf]
    %v291 = vld [vmem:[#allocation2 + $0x80] sm:$0xf]
    %v292 = vld [vmem:[#allocation2 + $0x84] sm:$0xf]
    %v293 = vld [vmem:[#allocation2 + $0x88] sm:$0xf]
    %v294 = vld [vmem:[#allocation2 + $0x8c] sm:$0xf]
    %v295 = vld [vmem:[#allocation2 + $0x90] sm:$0xf]
    %v296 = vld [vmem:[#allocation2 + $0x94] sm:$0xf]
    %v297 = vpack.c.bf16 %v280, %v279
    %v298 = vld [vmem:[%s4] ss:$0 sm:$0xff]
    %v315 = vunpack.c.l.b16 %v281
    %v316 = vunpack.c.l.b16 %v282
    %v317 = vunpack.c.l.b16 %v283
    %v318 = vunpack.c.l.b16 %v284
    %v319 = vunpack.c.l.b16 %v285
    %v320 = vunpack.c.l.b16 %v286
    %v321 = vunpack.c.l.b16 %v287
    %v322 = vunpack.c.l.b16 %v288
    %v323 = vunpack.c.l.b16 %v289
    %v324 = vunpack.c.l.b16 %v290
    %v325 = vunpack.c.l.b16 %v291
    %v326 = vunpack.c.l.b16 %v292
    %v327 = vunpack.c.l.b16 %v293
    %v328 = vunpack.c.l.b16 %v294
    %v329 = vunpack.c.l.b16 %v295
    %v330 = vunpack.c.l.b16 %v296
    %v331 = vpack.c.b16 %v316, %v315
    %v332 = vpack.c.b16 %v318, %v317
    %v333 = vpack.c.b16 %v320, %v319
    %v334 = vpack.c.b16 %v322, %v321
    %v335 = vpack.c.b16 %v324, %v323
    %v336 = vpack.c.b16 %v326, %v325
    %v337 = vpack.c.b16 %v328, %v327
    %v338 = vpack.c.b16 %v330, %v329
    %347 = vmatprep.subr.bf16.mxu0 0
    %348 = vmatpush1.bf16.msra.mxu0 %v331
    %349 = vmatprep.subr.bf16.mxu0 0
    %350 = vmatpush1.bf16.msra.mxu0 %v332
    %351 = vmatprep.subr.bf16.mxu0 0
    %352 = vmatpush1.bf16.msra.mxu0 %v333
    %353 = vmatprep.subr.bf16.mxu0 0
    %354 = vmatpush1.bf16.msra.mxu0 %v334
    %355 = vmatprep.subr.bf16.mxu0 0
    %356 = vmatpush1.bf16.msra.mxu0 %v335
    %357 = vmatprep.subr.bf16.mxu0 0
    %358 = vmatpush1.bf16.msra.mxu0 %v336
    %359 = vmatprep.subr.bf16.mxu0 0
    %360 = vmatpush1.bf16.msra.mxu0 %v337
    %361 = vmatprep.subr.bf16.mxu0 0
    %362 = vmatpush1.bf16.msra.mxu0 %v338
    %363 = vmatprep.subr.bf16.mxu0 0
    %364 = vmatpush1.bf16.msra.mxu0 0
    %365 = vmatprep.subr.bf16.mxu0 0
    %366 = vmatpush1.bf16.msra.mxu0 0
    %367 = vmatprep.subr.bf16.mxu0 0
    %368 = vmatpush1.bf16.msra.mxu0 0
    %369 = vmatprep.subr.bf16.mxu0 0
    %370 = vmatpush1.bf16.msra.mxu0 0
    %371 = vmatprep.subr.bf16.mxu0 0
    %372 = vmatpush1.bf16.msra.mxu0 0
    %373 = vmatprep.subr.bf16.mxu0 0
    %374 = vmatpush1.bf16.msra.mxu0 0
    %375 = vmatprep.subr.bf16.mxu0 0
    %376 = vmatpush1.bf16.msra.mxu0 0
    %377 = vmatprep.subr.bf16.mxu0 0
    %378 = vmatpush1.bf16.msra.mxu0 0
    %379 = vmatprep.mubr.bf16.mxu0 0
    %380 = vmatmul.mubr.bf16.gmra.mrb[0].mxu0 %v297
    %v381 = vpop.f32.mrb[0].mxu0
    %v382 = vadd.f32 %v298, %v381
    %v383 = vpop.f32.mrb[0].mxu0
    %v384 = vpop.f32.mrb[0].mxu0
    %v385 = vadd.f32 %v298, %v384
    %v386 = vpop.f32.mrb[0].mxu0
    %387 = vdwg.mxu0
    %v388 = vmax.f32 %v382, 0.0
    %v389 = vmax.f32 %v385, 0.0
    %v390 = vld [vmem:[#allocation4] sm:$0xff]
    %v391 = vld [vmem:[#allocation4 + $0x8] sm:$0xff]
    %v392 = vld [vmem:[#allocation4 + $0x10] sm:$0xff]
    %v393 = vld [vmem:[#allocation4 + $0x18] sm:$0xff]
    %v394 = vld [vmem:[#allocation4 + $0x20] sm:$0xff]
    %v395 = vld [vmem:[#allocation4 + $0x28] sm:$0xff]
    %v396 = vld [vmem:[#allocation4 + $0x30] sm:$0xff]
    %v397 = vld [vmem:[#allocation4 + $0x38] sm:$0xff]
    %v398 = vld [vmem:[#allocation4 + $0x40] sm:$0xff]
    %v399 = vld [vmem:[#allocation4 + $0x48] sm:$0xff]
    %v400 = vld [vmem:[#allocation4 + $0x50] sm:$0xff]
    %v401 = vld [vmem:[#allocation4 + $0x58] sm:$0xff]
    %v402 = vld [vmem:[#allocation4 + $0x60] sm:$0xff]
    %v403 = vld [vmem:[#allocation4 + $0x68] sm:$0xff]
    %v404 = vld [vmem:[#allocation4 + $0x70] sm:$0xff]
    %v405 = vld [vmem:[#allocation4 + $0x78] sm:$0xff]
    %v406 = vld [vmem:[#allocation4 + $0x80] sm:$0xff]
    %v407 = vld [vmem:[#allocation4 + $0x88] sm:$0xff]
    %v408 = vld [vmem:[#allocation4 + $0x90] sm:$0xff]
    %v409 = vld [vmem:[#allocation4 + $0x98] sm:$0xff]
    %v410 = vld [vmem:[#allocation4 + $0xa0] sm:$0xff]
    %v411 = vld [vmem:[#allocation4 + $0xa8] sm:$0xff]
    %v412 = vld [vmem:[#allocation4 + $0xb0] sm:$0xff]
    %v413 = vld [vmem:[#allocation4 + $0xb8] sm:$0xff]
    %v414 = vld [vmem:[#allocation4 + $0xc0] sm:$0xff]
    %v415 = vld [vmem:[#allocation4 + $0xc8] sm:$0xff]
    %v416 = vld [vmem:[#allocation4 + $0xd0] sm:$0xff]
    %v417 = vld [vmem:[#allocation4 + $0xd8] sm:$0xff]
    %v418 = vld [vmem:[#allocation4 + $0xe0] sm:$0xff]
    %v419 = vld [vmem:[#allocation4 + $0xe8] sm:$0xff]
    %v420 = vld [vmem:[#allocation4 + $0xf0] sm:$0xff]
    %v421 = vld [vmem:[#allocation4 + $0xf8] sm:$0xff]
    %v422 = vpack.c.bf16 %v216, %v215
    %v423 = vpack.c.bf16 %v389, %v388
    %s424 = scalar_lea.vmem %s4, 1
    %v425 = vld [vmem:[%s424] ss:$8 sm:$0x3]
    %v427 = vlaneseq
    %v428 = vshrl.u32 %v427, 7
    %v429 = vsub.s32 0, %v428
    %v430 = vrot.slane %v425, %v429
    %v431 = vlaneseq
    %v432 = vshrl.u32 %v431, 7
    %v433 = vsub.s32 1, %v432
    %v434 = vrot.slane %v425, %v433
    %v469 = vunpack.c.l.b16 %v390
    %v470 = vunpack.c.h.b16 %v390
    %v471 = vunpack.c.l.b16 %v391
    %v472 = vunpack.c.h.b16 %v391
    %v473 = vunpack.c.l.b16 %v392
    %v474 = vunpack.c.h.b16 %v392
    %v475 = vunpack.c.l.b16 %v393
    %v476 = vunpack.c.h.b16 %v393
    %v477 = vunpack.c.l.b16 %v394
    %v478 = vunpack.c.h.b16 %v394
    %v479 = vunpack.c.l.b16 %v395
    %v480 = vunpack.c.h.b16 %v395
    %v481 = vunpack.c.l.b16 %v396
    %v482 = vunpack.c.h.b16 %v396
    %v483 = vunpack.c.l.b16 %v397
    %v484 = vunpack.c.h.b16 %v397
    %v485 = vunpack.c.l.b16 %v398
    %v486 = vunpack.c.h.b16 %v398
    %v487 = vunpack.c.l.b16 %v399
    %v488 = vunpack.c.h.b16 %v399
    %v489 = vunpack.c.l.b16 %v400
    %v490 = vunpack.c.h.b16 %v400
    %v491 = vunpack.c.l.b16 %v401
    %v492 = vunpack.c.h.b16 %v401
    %v493 = vunpack.c.l.b16 %v402
    %v494 = vunpack.c.h.b16 %v402
    %v495 = vunpack.c.l.b16 %v403
    %v496 = vunpack.c.h.b16 %v403
    %v497 = vunpack.c.l.b16 %v404
    %v498 = vunpack.c.h.b16 %v404
    %v499 = vunpack.c.l.b16 %v405
    %v500 = vunpack.c.h.b16 %v405
    %v501 = vunpack.c.l.b16 %v406
    %v502 = vunpack.c.h.b16 %v406
    %v503 = vunpack.c.l.b16 %v407
    %v504 = vunpack.c.h.b16 %v407
    %v505 = vunpack.c.l.b16 %v408
    %v506 = vunpack.c.h.b16 %v408
    %v507 = vunpack.c.l.b16 %v409
    %v508 = vunpack.c.h.b16 %v409
    %v509 = vunpack.c.l.b16 %v410
    %v510 = vunpack.c.h.b16 %v410
    %v511 = vunpack.c.l.b16 %v411
    %v512 = vunpack.c.h.b16 %v411
    %v513 = vunpack.c.l.b16 %v412
    %v514 = vunpack.c.h.b16 %v412
    %v515 = vunpack.c.l.b16 %v413
    %v516 = vunpack.c.h.b16 %v413
    %v517 = vunpack.c.l.b16 %v414
    %v518 = vunpack.c.h.b16 %v414
    %v519 = vunpack.c.l.b16 %v415
    %v520 = vunpack.c.h.b16 %v415
    %v521 = vunpack.c.l.b16 %v416
    %v522 = vunpack.c.h.b16 %v416
    %v523 = vunpack.c.l.b16 %v417
    %v524 = vunpack.c.h.b16 %v417
    %v525 = vunpack.c.l.b16 %v418
    %v526 = vunpack.c.h.b16 %v418
    %v527 = vunpack.c.l.b16 %v419
    %v528 = vunpack.c.h.b16 %v419
    %v529 = vunpack.c.l.b16 %v420
    %v530 = vunpack.c.h.b16 %v420
    %v531 = vunpack.c.l.b16 %v421
    %v532 = vunpack.c.h.b16 %v421
    %v533 = vpack.c.b16 %v471, %v469
    %v534 = vpack.c.b16 %v472, %v470
    %v535 = vpack.c.b16 %v475, %v473
    %v536 = vpack.c.b16 %v476, %v474
    %v537 = vpack.c.b16 %v479, %v477
    %v538 = vpack.c.b16 %v480, %v478
    %v539 = vpack.c.b16 %v483, %v481
    %v540 = vpack.c.b16 %v484, %v482
    %v541 = vpack.c.b16 %v487, %v485
    %v542 = vpack.c.b16 %v488, %v486
    %v543 = vpack.c.b16 %v491, %v489
    %v544 = vpack.c.b16 %v492, %v490
    %v545 = vpack.c.b16 %v495, %v493
    %v546 = vpack.c.b16 %v496, %v494
    %v547 = vpack.c.b16 %v499, %v497
    %v548 = vpack.c.b16 %v500, %v498
    %v549 = vpack.c.b16 %v503, %v501
    %v550 = vpack.c.b16 %v504, %v502
    %v551 = vpack.c.b16 %v507, %v505
    %v552 = vpack.c.b16 %v508, %v506
    %v553 = vpack.c.b16 %v511, %v509
    %v554 = vpack.c.b16 %v512, %v510
    %v555 = vpack.c.b16 %v515, %v513
    %v556 = vpack.c.b16 %v516, %v514
    %v557 = vpack.c.b16 %v519, %v517
    %v558 = vpack.c.b16 %v520, %v518
    %v559 = vpack.c.b16 %v523, %v521
    %v560 = vpack.c.b16 %v524, %v522
    %v561 = vpack.c.b16 %v527, %v525
    %v562 = vpack.c.b16 %v528, %v526
    %v563 = vpack.c.b16 %v531, %v529
    %v564 = vpack.c.b16 %v532, %v530
    %597 = vmatprep.subr.bf16.mxu0 %v534
    %598 = vmatpush1.bf16.msra.mxu0 %v533
    %599 = vmatprep.subr.bf16.mxu0 %v536
    %600 = vmatpush1.bf16.msra.mxu0 %v535
    %601 = vmatprep.subr.bf16.mxu0 %v538
    %602 = vmatpush1.bf16.msra.mxu0 %v537
    %603 = vmatprep.subr.bf16.mxu0 %v540
    %604 = vmatpush1.bf16.msra.mxu0 %v539
    %605 = vmatprep.subr.bf16.mxu0 %v542
    %606 = vmatpush1.bf16.msra.mxu0 %v541
    %607 = vmatprep.subr.bf16.mxu0 %v544
    %608 = vmatpush1.bf16.msra.mxu0 %v543
    %609 = vmatprep.subr.bf16.mxu0 %v546
    %610 = vmatpush1.bf16.msra.mxu0 %v545
    %611 = vmatprep.subr.bf16.mxu0 %v548
    %612 = vmatpush1.bf16.msra.mxu0 %v547
    %613 = vmatprep.subr.bf16.mxu0 %v550
    %614 = vmatpush1.bf16.msra.mxu0 %v549
    %615 = vmatprep.subr.bf16.mxu0 %v552
    %616 = vmatpush1.bf16.msra.mxu0 %v551
    %617 = vmatprep.subr.bf16.mxu0 %v554
    %618 = vmatpush1.bf16.msra.mxu0 %v553
    %619 = vmatprep.subr.bf16.mxu0 %v556
    %620 = vmatpush1.bf16.msra.mxu0 %v555
    %621 = vmatprep.subr.bf16.mxu0 %v558
    %622 = vmatpush1.bf16.msra.mxu0 %v557
    %623 = vmatprep.subr.bf16.mxu0 %v560
    %624 = vmatpush1.bf16.msra.mxu0 %v559
    %625 = vmatprep.subr.bf16.mxu0 %v562
    %626 = vmatpush1.bf16.msra.mxu0 %v561
    %627 = vmatprep.subr.bf16.mxu0 %v564
    %628 = vmatpush1.bf16.msra.mxu0 %v563
    %629 = vmatprep.mubr.bf16.mxu0 %v423
    %630 = vmatmul.mubr.bf16.gmra.mrb[0].mxu0 %v422
    %v631 = vpop.f32.mrb[0].mxu0
    %v632 = vadd.f32 %v430, %v631
    %v633 = vpop.f32.mrb[0].mxu0
    %v634 = vadd.f32 %v434, %v633
    %v635 = vpop.f32.mrb[0].mxu0
    %v636 = vadd.f32 %v430, %v635
    %v637 = vpop.f32.mrb[0].mxu0
    %v638 = vadd.f32 %v434, %v637
    %639 = vdwg.mxu0
    %v640 = vmax.f32 %v632, 0.0
    %v641 = vmax.f32 %v634, 0.0
    %v642 = vmax.f32 %v636, 0.0
    %v643 = vmax.f32 %v638, 0.0
    %v644 = vld [vmem:[#allocation2 + $0x98] sm:$0xf]
    %v645 = vld [vmem:[#allocation2 + $0x9c] sm:$0xf]
    %v646 = vld [vmem:[#allocation2 + $0xa0] sm:$0xf]
    %v647 = vld [vmem:[#allocation2 + $0xa4] sm:$0xf]
    %v648 = vld [vmem:[#allocation2 + $0xa8] sm:$0xf]
    %v649 = vld [vmem:[#allocation2 + $0xac] sm:$0xf]
    %v650 = vld [vmem:[#allocation2 + $0xb0] sm:$0xf]
    %v651 = vld [vmem:[#allocation2 + $0xb4] sm:$0xf]
    %v652 = vld [vmem:[#allocation2 + $0xb8] sm:$0xf]
    %v653 = vld [vmem:[#allocation2 + $0xbc] sm:$0xf]
    %v654 = vld [vmem:[#allocation2 + $0xc0] sm:$0xf]
    %v655 = vld [vmem:[#allocation2 + $0xc4] sm:$0xf]
    %v656 = vld [vmem:[#allocation2 + $0xc8] sm:$0xf]
    %v657 = vld [vmem:[#allocation2 + $0xcc] sm:$0xf]
    %v658 = vld [vmem:[#allocation2 + $0xd0] sm:$0xf]
    %v659 = vld [vmem:[#allocation2 + $0xd4] sm:$0xf]
    %v660 = vld [vmem:[#allocation2 + $0xd8] sm:$0xf]
    %v661 = vld [vmem:[#allocation2 + $0xdc] sm:$0xf]
    %v662 = vld [vmem:[#allocation2 + $0xe0] sm:$0xf]
    %v663 = vld [vmem:[#allocation2 + $0xe4] sm:$0xf]
    %v664 = vld [vmem:[#allocation2 + $0xe8] sm:$0xf]
    %v665 = vld [vmem:[#allocation2 + $0xec] sm:$0xf]
    %v666 = vld [vmem:[#allocation2 + $0xf0] sm:$0xf]
    %v667 = vld [vmem:[#allocation2 + $0xf4] sm:$0xf]
    %v668 = vld [vmem:[#allocation2 + $0xf8] sm:$0xf]
    %v669 = vld [vmem:[#allocation2 + $0xfc] sm:$0xf]
    %v670 = vld [vmem:[#allocation2 + $0x100] sm:$0xf]
    %v671 = vld [vmem:[#allocation2 + $0x104] sm:$0xf]
    %v672 = vld [vmem:[#allocation2 + $0x108] sm:$0xf]
    %v673 = vld [vmem:[#allocation2 + $0x10c] sm:$0xf]
    %v674 = vld [vmem:[#allocation2 + $0x110] sm:$0xf]
    %v675 = vld [vmem:[#allocation2 + $0x114] sm:$0xf]
    %v676 = vpack.c.bf16 %v642, %v640
    %v677 = vpack.c.bf16 %v643, %v641
    %v678 = vld [vmem:[%s4 + $0x2] ss:$0 sm:$0xff]
    %v711 = vunpack.c.l.b16 %v644
    %v712 = vunpack.c.l.b16 %v645
    %v713 = vunpack.c.l.b16 %v646
    %v714 = vunpack.c.l.b16 %v647
    %v715 = vunpack.c.l.b16 %v648
    %v716 = vunpack.c.l.b16 %v649
    %v717 = vunpack.c.l.b16 %v650
    %v718 = vunpack.c.l.b16 %v651
    %v719 = vunpack.c.l.b16 %v652
    %v720 = vunpack.c.l.b16 %v653
    %v721 = vunpack.c.l.b16 %v654
    %v722 = vunpack.c.l.b16 %v655
    %v723 = vunpack.c.l.b16 %v656
    %v724 = vunpack.c.l.b16 %v657
    %v725 = vunpack.c.l.b16 %v658
    %v726 = vunpack.c.l.b16 %v659
    %v727 = vunpack.c.l.b16 %v660
    %v728 = vunpack.c.l.b16 %v661
    %v729 = vunpack.c.l.b16 %v662
    %v730 = vunpack.c.l.b16 %v663
    %v731 = vunpack.c.l.b16 %v664
    %v732 = vunpack.c.l.b16 %v665
    %v733 = vunpack.c.l.b16 %v666
    %v734 = vunpack.c.l.b16 %v667
    %v735 = vunpack.c.l.b16 %v668
    %v736 = vunpack.c.l.b16 %v669
    %v737 = vunpack.c.l.b16 %v670
    %v738 = vunpack.c.l.b16 %v671
    %v739 = vunpack.c.l.b16 %v672
    %v740 = vunpack.c.l.b16 %v673
    %v741 = vunpack.c.l.b16 %v674
    %v742 = vunpack.c.l.b16 %v675
    %v743 = vpack.c.b16 %v712, %v711
    %v744 = vpack.c.b16 %v714, %v713
    %v745 = vpack.c.b16 %v716, %v715
    %v746 = vpack.c.b16 %v718, %v717
    %v747 = vpack.c.b16 %v720, %v719
    %v748 = vpack.c.b16 %v722, %v721
    %v749 = vpack.c.b16 %v724, %v723
    %v750 = vpack.c.b16 %v726, %v725
    %v751 = vpack.c.b16 %v728, %v727
    %v752 = vpack.c.b16 %v730, %v729
    %v753 = vpack.c.b16 %v732, %v731
    %v754 = vpack.c.b16 %v734, %v733
    %v755 = vpack.c.b16 %v736, %v735
    %v756 = vpack.c.b16 %v738, %v737
    %v757 = vpack.c.b16 %v740, %v739
    %v758 = vpack.c.b16 %v742, %v741
    %775 = vmatprep.subr.bf16.mxu0 0
    %776 = vmatpush1.bf16.msra.mxu0 %v743
    %777 = vmatprep.subr.bf16.mxu0 0
    %778 = vmatpush1.bf16.msra.mxu0 %v744
    %779 = vmatprep.subr.bf16.mxu0 0
    %780 = vmatpush1.bf16.msra.mxu0 %v745
    %781 = vmatprep.subr.bf16.mxu0 0
    %782 = vmatpush1.bf16.msra.mxu0 %v746
    %783 = vmatprep.subr.bf16.mxu0 0
    %784 = vmatpush1.bf16.msra.mxu0 %v747
    %785 = vmatprep.subr.bf16.mxu0 0
    %786 = vmatpush1.bf16.msra.mxu0 %v748
    %787 = vmatprep.subr.bf16.mxu0 0
    %788 = vmatpush1.bf16.msra.mxu0 %v749
    %789 = vmatprep.subr.bf16.mxu0 0
    %790 = vmatpush1.bf16.msra.mxu0 %v750
    %791 = vmatprep.subr.bf16.mxu0 0
    %792 = vmatpush1.bf16.msra.mxu0 %v751
    %793 = vmatprep.subr.bf16.mxu0 0
    %794 = vmatpush1.bf16.msra.mxu0 %v752
    %795 = vmatprep.subr.bf16.mxu0 0
    %796 = vmatpush1.bf16.msra.mxu0 %v753
    %797 = vmatprep.subr.bf16.mxu0 0
    %798 = vmatpush1.bf16.msra.mxu0 %v754
    %799 = vmatprep.subr.bf16.mxu0 0
    %800 = vmatpush1.bf16.msra.mxu0 %v755
    %801 = vmatprep.subr.bf16.mxu0 0
    %802 = vmatpush1.bf16.msra.mxu0 %v756
    %803 = vmatprep.subr.bf16.mxu0 0
    %804 = vmatpush1.bf16.msra.mxu0 %v757
    %805 = vmatprep.subr.bf16.mxu0 0
    %806 = vmatpush1.bf16.msra.mxu0 %v758
    %807 = vmatprep.mubr.bf16.mxu0 %v677
    %808 = vmatmul.mubr.bf16.gmra.mrb[0].mxu0 %v676
    %v809 = vpop.f32.mrb[0].mxu0
    %v810 = vadd.f32 %v678, %v809
    %v811 = vpop.f32.mrb[0].mxu0
    %v812 = vpop.f32.mrb[0].mxu0
    %v813 = vadd.f32 %v678, %v812
    %v814 = vpop.f32.mrb[0].mxu0
    %815 = vdwg.mxu0
    %v816 = vmax.f32 %v810, 0.0
    %v817 = vmax.f32 %v813, 0.0
    %v818 = vld [vmem:[#allocation4 + $0x100] sm:$0xff]
    %v819 = vld [vmem:[#allocation4 + $0x108] sm:$0xff]
    %v820 = vld [vmem:[#allocation4 + $0x110] sm:$0xff]
    %v821 = vld [vmem:[#allocation4 + $0x118] sm:$0xff]
    %v822 = vld [vmem:[#allocation4 + $0x120] sm:$0xff]
    %v823 = vld [vmem:[#allocation4 + $0x128] sm:$0xff]
    %v824 = vld [vmem:[#allocation4 + $0x130] sm:$0xff]
    %v825 = vld [vmem:[#allocation4 + $0x138] sm:$0xff]
    %v826 = vld [vmem:[#allocation4 + $0x140] sm:$0xff]
    %v827 = vld [vmem:[#allocation4 + $0x148] sm:$0xff]
    %v828 = vld [vmem:[#allocation4 + $0x150] sm:$0xff]
    %v829 = vld [vmem:[#allocation4 + $0x158] sm:$0xff]
    %v830 = vld [vmem:[#allocation4 + $0x160] sm:$0xff]
    %v831 = vld [vmem:[#allocation4 + $0x168] sm:$0xff]
    %v832 = vld [vmem:[#allocation4 + $0x170] sm:$0xff]
    %v833 = vld [vmem:[#allocation4 + $0x178] sm:$0xff]
    %v834 = vld [vmem:[#allocation4 + $0x180] sm:$0xff]
    %v835 = vld [vmem:[#allocation4 + $0x188] sm:$0xff]
    %v836 = vpack.c.bf16 %v817, %v816
    %v855 = vunpack.c.l.b16 %v818
    %v856 = vunpack.c.h.b16 %v818
    %v857 = vunpack.c.l.b16 %v819
    %v858 = vunpack.c.h.b16 %v819
    %v859 = vunpack.c.l.b16 %v820
    %v860 = vunpack.c.h.b16 %v820
    %v861 = vunpack.c.l.b16 %v821
    %v862 = vunpack.c.h.b16 %v821
    %v863 = vunpack.c.l.b16 %v822
    %v864 = vunpack.c.h.b16 %v822
    %v865 = vunpack.c.l.b16 %v823
    %v866 = vunpack.c.h.b16 %v823
    %v867 = vunpack.c.l.b16 %v824
    %v868 = vunpack.c.h.b16 %v824
    %v869 = vunpack.c.l.b16 %v825
    %v870 = vunpack.c.h.b16 %v825
    %v871 = vunpack.c.l.b16 %v826
    %v872 = vunpack.c.h.b16 %v826
    %v873 = vunpack.c.l.b16 %v827
    %v874 = vunpack.c.h.b16 %v827
    %v875 = vunpack.c.l.b16 %v828
    %v876 = vunpack.c.h.b16 %v828
    %v877 = vunpack.c.l.b16 %v829
    %v878 = vunpack.c.h.b16 %v829
    %v879 = vunpack.c.l.b16 %v830
    %v880 = vunpack.c.h.b16 %v830
    %v881 = vunpack.c.l.b16 %v831
    %v882 = vunpack.c.h.b16 %v831
    %v883 = vunpack.c.l.b16 %v832
    %v884 = vunpack.c.h.b16 %v832
    %v885 = vunpack.c.l.b16 %v833
    %v886 = vunpack.c.h.b16 %v833
    %v887 = vunpack.c.l.b16 %v834
    %v888 = vunpack.c.h.b16 %v834
    %v889 = vunpack.c.l.b16 %v835
    %v890 = vunpack.c.h.b16 %v835
    %v891 = vpack.c.b16 %v857, %v855
    %v892 = vpack.c.b16 %v858, %v856
    %v893 = vpack.c.b16 %v861, %v859
    %v894 = vpack.c.b16 %v862, %v860
    %v895 = vpack.c.b16 %v865, %v863
    %v896 = vpack.c.b16 %v866, %v864
    %v897 = vpack.c.b16 %v869, %v867
    %v898 = vpack.c.b16 %v870, %v868
    %v899 = vpack.c.b16 %v873, %v871
    %v900 = vpack.c.b16 %v874, %v872
    %v901 = vpack.c.b16 %v877, %v875
    %v902 = vpack.c.b16 %v878, %v876
    %v903 = vpack.c.b16 %v881, %v879
    %v904 = vpack.c.b16 %v882, %v880
    %v905 = vpack.c.b16 %v885, %v883
    %v906 = vpack.c.b16 %v886, %v884
    %v907 = vpack.c.b16 %v889, %v887
    %v908 = vpack.c.b16 %v890, %v888
    %927 = vmatprep.subr.bf16.mxu0 %v892
    %928 = vmatpush1.bf16.msra.mxu0 %v891
    %929 = vmatprep.subr.bf16.mxu0 %v894
    %930 = vmatpush1.bf16.msra.mxu0 %v893
    %931 = vmatprep.subr.bf16.mxu0 %v896
    %932 = vmatpush1.bf16.msra.mxu0 %v895
    %933 = vmatprep.subr.bf16.mxu0 %v898
    %934 = vmatpush1.bf16.msra.mxu0 %v897
    %935 = vmatprep.subr.bf16.mxu0 %v900
    %936 = vmatpush1.bf16.msra.mxu0 %v899
    %937 = vmatprep.subr.bf16.mxu0 %v902
    %938 = vmatpush1.bf16.msra.mxu0 %v901
    %939 = vmatprep.subr.bf16.mxu0 %v904
    %940 = vmatpush1.bf16.msra.mxu0 %v903
    %941 = vmatprep.subr.bf16.mxu0 %v906
    %942 = vmatpush1.bf16.msra.mxu0 %v905
    %943 = vmatprep.subr.bf16.mxu0 %v908
    %944 = vmatpush1.bf16.msra.mxu0 %v907
    %945 = vmatprep.subr.bf16.mxu0 0
    %946 = vmatpush1.bf16.msra.mxu0 0
    %947 = vmatprep.subr.bf16.mxu0 0
    %948 = vmatpush1.bf16.msra.mxu0 0
    %949 = vmatprep.subr.bf16.mxu0 0
    %950 = vmatpush1.bf16.msra.mxu0 0
    %951 = vmatprep.subr.bf16.mxu0 0
    %952 = vmatpush1.bf16.msra.mxu0 0
    %953 = vmatprep.subr.bf16.mxu0 0
    %954 = vmatpush1.bf16.msra.mxu0 0
    %955 = vmatprep.subr.bf16.mxu0 0
    %956 = vmatpush1.bf16.msra.mxu0 0
    %957 = vmatprep.subr.bf16.mxu0 0
    %958 = vmatpush1.bf16.msra.mxu0 0
    %959 = vmatprep.mubr.bf16.mxu0 %v64
    %960 = vmatmul.mubr.bf16.gmra.mrb[0].mxu0 %v836
    %v961 = vpop.f32.mrb[0].mxu0
    %v962 = vadd.f32 0.0, %v961
    %v963 = vpop.f32.mrb[0].mxu0
    %v964 = vadd.f32 0.0, %v963
    %v965 = vpop.f32.mrb[0].mxu0
    %v966 = vadd.f32 0.0, %v965
    %v967 = vpop.f32.mrb[0].mxu0
    %v968 = vadd.f32 0.0, %v967
    %969 = vdwg.mxu0
    %v970 = vsub.f32 0.0, %v962
    %v971 = vsub.f32 0.0, %v966
    %v972 = vmul.f32 %v970, 1.442695
    %v973 = vpow.pop %v972
    %v974 = vmul.f32 %v971, 1.442695
    %v975 = vpow.pop %v974
    %v976 = vadd.f32 %v973, 1.0
    %v977 = vadd.f32 %v975, 1.0
    %v978 = vrcp.pop %v976
    %v979 = vrcp.pop %v977
    %v980 = vtanh.pop %v962
    %v981 = vtanh.pop %v966
    %v982 = vsub.f32 0.0, %v964
    %v983 = vsub.f32 0.0, %v968
    %v984 = vmul.f32 %v982, 1.442695
    %v985 = vpow.pop %v984
    %v986 = vmul.f32 %v983, 1.442695
    %v987 = vpow.pop %v986
    %v988 = vadd.f32 %v985, 1.0
    %v989 = vadd.f32 %v987, 1.0
    %v990 = vrcp.pop %v988
    %v991 = vrcp.pop %v989
    %994 = vrot.lane.b32.xlu0 %v980, 64
    %v995 = vpop.permute.xlu0 %994
    %996 = vrot.lane.b32.xlu0 %v981, 64
    %v997 = vpop.permute.xlu0 %996
    %v1000 = vmul.f32 %v978, %v995
    %v1001 = vmul.f32 %v979, %v997
    %v1002 = vtanh.pop %v1000
    %v1003 = vtanh.pop %v1001
    %v1004 = vmul.f32 %v990, %v1002
    %v1005 = vmul.f32 %v991, %v1003
    %v1006 = vld [vmem:[#allocation4 + $0x190] sm:$0xff]
    %v1007 = vld [vmem:[#allocation4 + $0x198] sm:$0xff]
    %v1008 = vld [vmem:[#allocation4 + $0x1a0] sm:$0xff]
    %v1009 = vld [vmem:[#allocation4 + $0x1a8] sm:$0xff]
    %v1010 = vld [vmem:[#allocation4 + $0x1b0] sm:$0xff]
    %v1011 = vld [vmem:[#allocation4 + $0x1b8] sm:$0xff]
    %v1012 = vld [vmem:[#allocation4 + $0x1c0] sm:$0xff]
    %v1013 = vld [vmem:[#allocation4 + $0x1c8] sm:$0xff]
    %v1014 = vpack.c.bf16 %v1005, %v1004
    %s1015 = scalar_lea.vmem %s4, 3
    %v1016 = vld [vmem:[%s1015] ss:$8 sm:$0x3]
    %v1018 = vlaneseq
    %v1019 = vshrl.u32 %v1018, 7
    %v1020 = vsub.s32 0, %v1019
    %v1021 = vrot.slane %v1016, %v1020
    %v1022 = vlaneseq
    %v1023 = vshrl.u32 %v1022, 7
    %v1024 = vsub.s32 1, %v1023
    %v1025 = vrot.slane %v1016, %v1024
    %v1036 = vunpack.c.l.b16 %v1006
    %v1037 = vunpack.c.h.b16 %v1006
    %v1038 = vunpack.c.l.b16 %v1007
    %v1039 = vunpack.c.h.b16 %v1007
    %v1040 = vunpack.c.l.b16 %v1008
    %v1041 = vunpack.c.h.b16 %v1008
    %v1042 = vunpack.c.l.b16 %v1009
    %v1043 = vunpack.c.h.b16 %v1009
    %v1044 = vunpack.c.l.b16 %v1010
    %v1045 = vunpack.c.h.b16 %v1010
    %v1046 = vunpack.c.l.b16 %v1011
    %v1047 = vunpack.c.h.b16 %v1011
    %v1048 = vunpack.c.l.b16 %v1012
    %v1049 = vunpack.c.h.b16 %v1012
    %v1050 = vunpack.c.l.b16 %v1013
    %v1051 = vunpack.c.h.b16 %v1013
    %v1052 = vpack.c.b16 %v1038, %v1036
    %v1053 = vpack.c.b16 %v1039, %v1037
    %v1054 = vpack.c.b16 %v1042, %v1040
    %v1055 = vpack.c.b16 %v1043, %v1041
    %v1056 = vpack.c.b16 %v1046, %v1044
    %v1057 = vpack.c.b16 %v1047, %v1045
    %v1058 = vpack.c.b16 %v1050, %v1048
    %v1059 = vpack.c.b16 %v1051, %v1049
    %vm1068 = vcmask 523264
    %v1070 = vsel %vm1068, %v1014, 0
    %1072 = vmatprep.subr.bf16.mxu0 %v1053
    %1073 = vmatpush1.bf16.msra.mxu0 %v1052
    %1074 = vmatprep.subr.bf16.mxu0 %v1055
    %1075 = vmatpush1.bf16.msra.mxu0 %v1054
    %1076 = vmatprep.subr.bf16.mxu0 %v1057
    %1077 = vmatpush1.bf16.msra.mxu0 %v1056
    %1078 = vmatprep.subr.bf16.mxu0 %v1059
    %1079 = vmatpush1.bf16.msra.mxu0 %v1058
    %1080 = vmatprep.subr.bf16.mxu0 0
    %1081 = vmatpush1.bf16.msra.mxu0 0
    %1082 = vmatprep.subr.bf16.mxu0 0
    %1083 = vmatpush1.bf16.msra.mxu0 0
    %1084 = vmatprep.subr.bf16.mxu0 0
    %1085 = vmatpush1.bf16.msra.mxu0 0
    %1086 = vmatprep.subr.bf16.mxu0 0
    %1087 = vmatpush1.bf16.msra.mxu0 0
    %1088 = vmatprep.subr.bf16.mxu0 0
    %1089 = vmatpush1.bf16.msra.mxu0 0
    %1090 = vmatprep.subr.bf16.mxu0 0
    %1091 = vmatpush1.bf16.msra.mxu0 0
    %1092 = vmatprep.subr.bf16.mxu0 0
    %1093 = vmatpush1.bf16.msra.mxu0 0
    %1094 = vmatprep.subr.bf16.mxu0 0
    %1095 = vmatpush1.bf16.msra.mxu0 0
    %1096 = vmatprep.subr.bf16.mxu0 0
    %1097 = vmatpush1.bf16.msra.mxu0 0
    %1098 = vmatprep.subr.bf16.mxu0 0
    %1099 = vmatpush1.bf16.msra.mxu0 0
    %1100 = vmatprep.subr.bf16.mxu0 0
    %1101 = vmatpush1.bf16.msra.mxu0 0
    %1102 = vmatprep.subr.bf16.mxu0 0
    %1103 = vmatpush1.bf16.msra.mxu0 0
    %1104 = vmatprep.mubr.bf16.mxu0 0
    %1105 = vmatmul.mubr.bf16.gmra.mrb[0].mxu0 %v1070
    %v1106 = vpop.f32.mrb[0].mxu0
    %v1107 = vadd.f32 %v1021, %v1106
    %v1108 = vpop.f32.mrb[0].mxu0
    %v1109 = vadd.f32 %v1025, %v1108
    %v1110 = vpop.f32.mrb[0].mxu0
    %v1111 = vadd.f32 %v1021, %v1110
    %v1112 = vpop.f32.mrb[0].mxu0
    %v1113 = vadd.f32 %v1025, %v1112
    %1114 = vdwg.mxu0
    %v1115 = vsub.f32 0.0, %v1107
    %v1116 = vsub.f32 0.0, %v1111
    %v1117 = vmul.f32 %v1115, 1.442695
    %v1118 = vpow.pop %v1117
    %v1119 = vmul.f32 %v1116, 1.442695
    %v1120 = vpow.pop %v1119
    %v1121 = vadd.f32 %v1118, 1.0
    %v1122 = vadd.f32 %v1120, 1.0
    %v1123 = vrcp.pop %v1121
    %v1124 = vrcp.pop %v1122
    %v1125 = vtanh.pop %v1107
    %v1126 = vtanh.pop %v1111
    %v1127 = vsub.f32 0.0, %v1109
    %v1128 = vsub.f32 0.0, %v1113
    %v1129 = vmul.f32 %v1127, 1.442695
    %v1130 = vpow.pop %v1129
    %v1131 = vmul.f32 %v1128, 1.442695
    %v1132 = vpow.pop %v1131
    %v1133 = vadd.f32 %v1130, 1.0
    %v1134 = vadd.f32 %v1132, 1.0
    %v1135 = vrcp.pop %v1133
    %v1136 = vrcp.pop %v1134
    %1139 = vrot.lane.b32.xlu0 %v1125, 64
    %v1140 = vpop.permute.xlu0 %1139
    %1141 = vrot.lane.b32.xlu0 %v1126, 64
    %v1142 = vpop.permute.xlu0 %1141
    %v1145 = vmul.f32 %v1123, %v1140
    %v1146 = vmul.f32 %v1124, %v1142
    %v1147 = vtanh.pop %v1145
    %v1148 = vtanh.pop %v1146
    %v1149 = vmul.f32 %v1135, %v1147
    %v1150 = vmul.f32 %v1136, %v1148
    %v1151 = vld [vmem:[#allocation2 + $0x118] sm:$0xf]
    %v1152 = vld [vmem:[#allocation2 + $0x11c] sm:$0xf]
    %v1153 = vld [vmem:[#allocation2 + $0x120] sm:$0xf]
    %v1154 = vld [vmem:[#allocation2 + $0x124] sm:$0xf]
    %v1155 = vld [vmem:[#allocation2 + $0x128] sm:$0xf]
    %v1156 = vld [vmem:[#allocation2 + $0x12c] sm:$0xf]
    %v1157 = vld [vmem:[#allocation2 + $0x130] sm:$0xf]
    %v1158 = vld [vmem:[#allocation2 + $0x134] sm:$0xf]
    %v1159 = vpack.c.bf16 %v1150, %v1149
    %v1160 = vld [vmem:[%s4 + $0x4] ss:$0 sm:$0xff]
    %v1169 = vunpack.c.l.b16 %v1151
    %v1170 = vunpack.c.l.b16 %v1152
    %v1171 = vunpack.c.l.b16 %v1153
    %v1172 = vunpack.c.l.b16 %v1154
    %v1173 = vunpack.c.l.b16 %v1155
    %v1174 = vunpack.c.l.b16 %v1156
    %v1175 = vunpack.c.l.b16 %v1157
    %v1176 = vunpack.c.l.b16 %v1158
    %v1177 = vpack.c.b16 %v1170, %v1169
    %v1178 = vpack.c.b16 %v1172, %v1171
    %v1179 = vpack.c.b16 %v1174, %v1173
    %v1180 = vpack.c.b16 %v1176, %v1175
    %v1186 = vsel %vm1068, %v1159, 0
    %1188 = vmatprep.subr.bf16.mxu0 0
    %1189 = vmatpush1.bf16.msra.mxu0 %v1177
    %1190 = vmatprep.subr.bf16.mxu0 0
    %1191 = vmatpush1.bf16.msra.mxu0 %v1178
    %1192 = vmatprep.subr.bf16.mxu0 0
    %1193 = vmatpush1.bf16.msra.mxu0 %v1179
    %1194 = vmatprep.subr.bf16.mxu0 0
    %1195 = vmatpush1.bf16.msra.mxu0 %v1180
    %1196 = vmatprep.subr.bf16.mxu0 0
    %1197 = vmatpush1.bf16.msra.mxu0 0
    %1198 = vmatprep.subr.bf16.mxu0 0
    %1199 = vmatpush1.bf16.msra.mxu0 0
    %1200 = vmatprep.subr.bf16.mxu0 0
    %1201 = vmatpush1.bf16.msra.mxu0 0
    %1202 = vmatprep.subr.bf16.mxu0 0
    %1203 = vmatpush1.bf16.msra.mxu0 0
    %1204 = vmatprep.subr.bf16.mxu0 0
    %1205 = vmatpush1.bf16.msra.mxu0 0
    %1206 = vmatprep.subr.bf16.mxu0 0
    %1207 = vmatpush1.bf16.msra.mxu0 0
    %1208 = vmatprep.subr.bf16.mxu0 0
    %1209 = vmatpush1.bf16.msra.mxu0 0
    %1210 = vmatprep.subr.bf16.mxu0 0
    %1211 = vmatpush1.bf16.msra.mxu0 0
    %1212 = vmatprep.subr.bf16.mxu0 0
    %1213 = vmatpush1.bf16.msra.mxu0 0
    %1214 = vmatprep.subr.bf16.mxu0 0
    %1215 = vmatpush1.bf16.msra.mxu0 0
    %1216 = vmatprep.subr.bf16.mxu0 0
    %1217 = vmatpush1.bf16.msra.mxu0 0
    %1218 = vmatprep.subr.bf16.mxu0 0
    %1219 = vmatpush1.bf16.msra.mxu0 0
    %1220 = vmatprep.mubr.bf16.mxu0 0
    %1221 = vmatmul.mubr.bf16.gmra.mrb[0].mxu0 %v1186
    %v1222 = vpop.f32.mrb[0].mxu0
    %v1223 = vadd.f32 %v1160, %v1222
    %v1224 = vpop.f32.mrb[0].mxu0
    %v1225 = vpop.f32.mrb[0].mxu0
    %v1226 = vadd.f32 %v1160, %v1225
    %v1227 = vpop.f32.mrb[0].mxu0
    %1228 = vdwg.mxu0
    %v1229 = vlaneseq
    %v1230 = vand.u32 %v1229, 127
    %vm1231 = vcmp.eq.s32.totalorder %v1230, 0
    %v1232 = vtanh.pop %v1223
    %v1233 = vtanh.pop %v1226
    %v1234 = vsub.f32 0.0, %v1223
    %v1235 = vsub.f32 0.0, %v1226
    %v1236 = vmul.f32 %v1234, 1.442695
    %v1237 = vpow.pop %v1236
    %v1238 = vmul.f32 %v1235, 1.442695
    %v1239 = vpow.pop %v1238
    %v1240 = vadd.f32 %v1237, 1.0
    %v1241 = vadd.f32 %v1239, 1.0
    %v1242 = vrcp.pop %v1240
    %v1243 = vmul.f32 1.0, %v1242
    %v1244 = vrcp.pop %v1241
    %v1245 = vmul.f32 1.0, %v1244
    %v1246 = vsel %vm1231, %v1232, %v1243
    %v1247 = vsel %vm1231, %v1233, %v1245
    %1248 = vst [vmem:[%s5] sm:$0xff] %v1246
    %1249 = vst [vmem:[%s5 + $0x8] sm:$0xff] %v1247
    // Predicated region
    $region30: #{control_module_forward.1} parent=1 // pred_check
      _
    $region31: #{control_module_forward.1} parent=1 // pred_check_branch
      %1251 = sbr.rel (0) target = $region33
    $region32: #{control_module_forward.1} parent=1 // pred_region
      _
    $region33: #{control_module_forward.1} parent=1 // pred_fallthru
      _
    // Predicated region
    $region34: #{control_module_forward.1} parent=1 // pred_check
      _
    $region35: #{control_module_forward.1} parent=1 // pred_check_branch
      %1253 = sbr.rel (0) target = $region37
    $region36: #{control_module_forward.1} parent=1 // pred_region
      _
    $region37: #{control_module_forward.1} parent=1 // pred_fallthru
      _
    %1254 = vsyncpa [#allocation3], 1
    %1255 = vsyncpa [#allocation5], 1

</llo_original>
